<compile_context>
chip_gen: v6e
topology: v6e:2x2x1
jax: 0.10.0
libtpu: 0.0.40
codegen_flags: <defaults>
</compile_context>

<pallas_src>
import functools
import math

import jax
import jax.numpy as jnp
from jax.experimental import pallas as pl
from jax.experimental.pallas import tpu as pltpu


def _round_up(x, m):
    return ((x + m - 1) // m) * m


def _choose_tm(batch, tm_max):
    """Pick a batch tile (multiple of 8) that minimizes padded writeback rows
    plus per-grid-step overhead, preferring >= 2 grid steps (v7x megacore)."""
    padded_b8 = _round_up(batch, 8)
    cap = max(8, min(_round_up(tm_max, 8), padded_b8))
    cands = list(range(8, cap + 1, 8))
    # Prefer at least two grid steps whenever the batch allows it.
    multi = [t for t in cands if _round_up(batch, t) // t >= 2]
    if multi:
        cands = multi
    # Cost model in "row equivalents": rows written + ~96 rows per grid step
    # (0.35 us step overhead / ~4 ns per 4 KiB row at ~1 TB/s).
    step_overhead_rows = 96

    def cost(t):
        pb = _round_up(batch, t)
        return pb + (pb // t) * step_overhead_rows

    return min(cands, key=lambda t: (cost(t), -t))


def _choose_n_chunk(flat, tm):
    """Lane-aligned layer-3 output chunk; smaller chunks for bigger tiles so
    the f32 logits temporary (tm * n_chunk * 4 B) stays ~<= 1 MiB."""
    preferred = (512, 256, 128) if tm <= 256 else (256, 128)
    for c in preferred:
        if c <= flat and flat % c == 0:
            return c
    return flat  # fallback (correct; masked lane stores if flat % 128 != 0)


def _vmem_estimate_bytes(tm, latent, d1, d2, flat, n_chunk, out_bytes):
    f32, bf16 = 4, 2
    est = 0
    est += 2 * tm * latent * f32                               # z stream (x2 buf)
    est += 2 * tm * flat * out_bytes                           # out stream (x2 buf)
    est += 2 * (latent * d1 + d1 * d2 + d2 * flat) * bf16      # weights (x2 buf)
    est += 2 * (d1 + d2 + flat) * f32                          # biases (x2 buf)
    est += tm * (d1 + d2) * f32                                # h1, h2 temps
    est += tm * d2 * bf16                                      # h2 bf16 copy
    est += 2 * tm * n_chunk * f32                              # logits temp + slack
    return est


def _decoder_kernel(z_ref, w1_ref, b1_ref, w2_ref, b2_ref, w3_ref, b3_ref,
                    o_ref, *, n_chunk):
    # Layer 1: Linear + ReLU  (bf16 operands -> f32 MXU accumulation)
    z_bf = z_ref[...].astype(jnp.bfloat16)
    h1 = jnp.dot(z_bf, w1_ref[...], preferred_element_type=jnp.float32)
    h1 = jnp.maximum(h1 + b1_ref[...], 0.0)

    # Layer 2: Linear + ReLU
    h2 = jnp.dot(h1.astype(jnp.bfloat16), w2_ref[...],
                 preferred_element_type=jnp.float32)
    h2 = jnp.maximum(h2 + b2_ref[...], 0.0)
    h2_bf = h2.astype(jnp.bfloat16)

    # Layer 3: Linear + Sigmoid, chunked along N (lane-aligned, starts are
    # multiples of 128) so logits never materialize as one (TM, flat) f32.
    flat = o_ref.shape[-1]
    for j in range(flat // n_chunk):
        lo = j * n_chunk
        logits = jnp.dot(h2_bf, w3_ref[:, lo:lo + n_chunk],
                         preferred_element_type=jnp.float32)
        logits = logits + b3_ref[:, lo:lo + n_chunk]
        o_ref[:, lo:lo + n_chunk] = jax.nn.sigmoid(logits).astype(o_ref.dtype)


def vae_mlp_decoder(z, params, shape, *, tm=512, out_dtype=jnp.float32):
    """Run the fused decoder kernel.

    z:         (B, latent_dim) float32
    params:    dict with w1,b1,w2,b2,w3,b3. Weights are (in, out) bf16,
               biases are (1, out) f32.
    shape:     (C, H, W) output image shape
    tm:        max batch-tile rows per grid step (rounded to multiple of 8).
    out_dtype: float32 (torch parity, default) or bfloat16 (halves the
               dominant HBM writeback stream; contract change).
    Returns (B, C, H, W) out_dtype.
    """
    B, latent = z.shape
    flat = int(shape[0] * shape[1] * shape[2])
    d1 = params["w1"].shape[1]
    d2 = params["w2"].shape[1]

    TM = _choose_tm(B, tm)
    padded_B = _round_up(B, TM)
    if padded_B != B:
        z = jnp.pad(z, ((0, padded_B - B), (0, 0)))
    grid = (padded_B // TM,)

    n_chunk = _choose_n_chunk(flat, TM)
    kernel = functools.partial(_decoder_kernel, n_chunk=n_chunk)

    out_bytes = jnp.dtype(out_dtype).itemsize
    vmem_limit = int(min(
        128 * 1024 * 1024,
        max(32 * 1024 * 1024,
            int(1.5 * _vmem_estimate_bytes(TM, latent, d1, d2, flat,
                                           n_chunk, out_bytes)))))

    # Weights / biases: constant index_map -> loaded once, VMEM-resident
    # across all grid steps. z / output stream through double-buffered tiles.
    const = lambda i: (0, 0)
    out_flat = pl.pallas_call(
        kernel,
        out_shape=jax.ShapeDtypeStruct((padded_B, flat), out_dtype),
        grid=grid,
        in_specs=[
            pl.BlockSpec((TM, latent), lambda i: (i, 0)),
            pl.BlockSpec(params["w1"].shape, const),
            pl.BlockSpec(params["b1"].shape, const),
            pl.BlockSpec(params["w2"].shape, const),
            pl.BlockSpec(params["b2"].shape, const),
            pl.BlockSpec(params["w3"].shape, const),
            pl.BlockSpec(params["b3"].shape, const),
        ],
        out_specs=pl.BlockSpec((TM, flat), lambda i: (i, 0)),
        compiler_params=pltpu.CompilerParams(
            dimension_semantics=("parallel",),   # megacore split on v7x
            vmem_limit_bytes=vmem_limit,         # guard v5e's 16 MiB default
        ),
    )(z, params["w1"], params["b1"], params["w2"], params["b2"],
      params["w3"], params["b3"])

    # Glue: drop batch padding, reshape to NCHW like torch .view(-1, *shape).
    return out_flat[:B].reshape(B, *shape)


def init_params(key, latent_dim, units_dim, flat):
    """Deterministic init mimicking nn.Linear default (uniform +-1/sqrt(fan_in)).

    Weights stored as (in_features, out_features) bf16 for direct x @ W on the
    MXU; biases stay f32 (added on the VPU in f32)."""
    dims = [latent_dim, *units_dim, flat]
    params = {}
    for i in range(3):
        fan_in, fan_out = dims[i], dims[i + 1]
        bound = 1.0 / math.sqrt(fan_in)
        key, kw, kb = jax.random.split(key, 3)
        w = jax.random.uniform(kw, (fan_in, fan_out), jnp.float32,
                               minval=-bound, maxval=bound)
        b = jax.random.uniform(kb, (1, fan_out), jnp.float32,
                               minval=-bound, maxval=bound)
        params[f"w{i+1}"] = w.astype(jnp.bfloat16)
        params[f"b{i+1}"] = b
    return params


if __name__ == "__main__":
    # Small shapes consistent with the module: output image (4, 16, 16),
    # latent_dim=32, units_dim=(128, 128). batch=16: _choose_tm picks TM=8 so
    # the 2-step batch grid + resident-weight path are actually exercised.
    shape = (4, 16, 16)                 # (C, H, W)
    latent_dim = 32
    units_dim = (128, 128)
    batch = 16
    flat = shape[0] * shape[1] * shape[2]

    key = jax.random.PRNGKey(0)
    key, kz = jax.random.split(key)
    z = jax.random.normal(kz, (batch, latent_dim), jnp.float32)
    params = init_params(key, latent_dim, units_dim, flat)

    out = vae_mlp_decoder(z, params, shape)
    out = jax.block_until_ready(out)

    # Sanity: shape/dtype and sigmoid range.
    assert out.shape == (batch, *shape), out.shape
    assert out.dtype == jnp.float32
    assert bool(jnp.all(out >= 0.0)) and bool(jnp.all(out <= 1.0))

    # Reference 1: pure-JAX emulation of the exact kernel math (bf16 matmuls,
    # f32 accumulation / activations) -> tight tolerance.
    zb = z.astype(jnp.bfloat16)
    h1 = jnp.maximum(
        jnp.dot(zb, params["w1"], preferred_element_type=jnp.float32)
        + params["b1"], 0.0)
    h2 = jnp.maximum(
        jnp.dot(h1.astype(jnp.bfloat16), params["w2"],
                preferred_element_type=jnp.float32) + params["b2"], 0.0)
    ref_bf16 = jax.nn.sigmoid(
        jnp.dot(h2.astype(jnp.bfloat16), params["w3"],
                preferred_element_type=jnp.float32)
        + params["b3"]).reshape(batch, *shape)
    assert jnp.allclose(out, ref_bf16, atol=1e-4, rtol=1e-4)

    # Reference 2: full-f32 math -> loose tolerance (bf16 weight quantization).
    w1f, w2f, w3f = (params["w1"].astype(jnp.float32),
                     params["w2"].astype(jnp.float32),
                     params["w3"].astype(jnp.float32))
    h1f = jnp.maximum(z @ w1f + params["b1"], 0.0)
    h2f = jnp.maximum(h1f @ w2f + params["b2"], 0.0)
    ref_f32 = jax.nn.sigmoid(h2f @ w3f + params["b3"]).reshape(batch, *shape)
    assert jnp.allclose(out, ref_f32, atol=3e-2, rtol=3e-2)

    # Optional bf16-output path (halves the dominant HBM writeback stream).
    out_bf = vae_mlp_decoder(z, params, shape, out_dtype=jnp.bfloat16)
    out_bf = jax.block_until_ready(out_bf)
    assert out_bf.shape == (batch, *shape) and out_bf.dtype == jnp.bfloat16
    assert jnp.allclose(out_bf.astype(jnp.float32), ref_bf16, atol=5e-3)

    print("KERNEL_OK")
</pallas_src>

<mosaic_0001>
module attributes {stable_mosaic.version = 11 : i64} {
  func.func @_decoder_kernel(%arg0: i32, %arg1: memref<8x32xf32, #tpu.memory_space<vmem>>, %arg2: memref<32x128xbf16, #tpu.memory_space<vmem>>, %arg3: memref<1x128xf32, #tpu.memory_space<vmem>>, %arg4: memref<128x128xbf16, #tpu.memory_space<vmem>>, %arg5: memref<1x128xf32, #tpu.memory_space<vmem>>, %arg6: memref<128x1024xbf16, #tpu.memory_space<vmem>>, %arg7: memref<1x1024xf32, #tpu.memory_space<vmem>>, %arg8: memref<8x1024xf32, #tpu.memory_space<vmem>>) attributes {dimension_semantics = [#tpu.dimension_semantics<parallel>], iteration_bounds = array<i64: 2>, scalar_prefetch = 0 : i64, scratch_operands = 0 : i64, tpu.core_type = #tpu.core_type<tc>, window_params = [{transform_indices = @transform_0, window_bounds = array<i64: 8, 32>}, {pipeline_mode = #tpu.pipeline_mode<synchronous>, transform_indices = @transform_1, window_bounds = array<i64: 32, 128>}, {pipeline_mode = #tpu.pipeline_mode<synchronous>, transform_indices = @transform_2, window_bounds = array<i64: 1, 128>}, {pipeline_mode = #tpu.pipeline_mode<synchronous>, transform_indices = @transform_3, window_bounds = array<i64: 128, 128>}, {pipeline_mode = #tpu.pipeline_mode<synchronous>, transform_indices = @transform_4, window_bounds = array<i64: 1, 128>}, {pipeline_mode = #tpu.pipeline_mode<synchronous>, transform_indices = @transform_5, window_bounds = array<i64: 128, 1024>}, {pipeline_mode = #tpu.pipeline_mode<synchronous>, transform_indices = @transform_6, window_bounds = array<i64: 1, 1024>}, {transform_indices = @transform_7, window_bounds = array<i64: 8, 1024>}]} {
    %c0 = arith.constant 0 : index
    %c0_0 = arith.constant 0 : index
    %0 = vector.load %arg1[%c0, %c0_0] : memref<8x32xf32, #tpu.memory_space<vmem>>, vector<8x32xf32>
    %1 = arith.truncf %0 : vector<8x32xf32> to vector<8x32xbf16>
    %c0_1 = arith.constant 0 : index
    %c0_2 = arith.constant 0 : index
    %2 = vector.load %arg2[%c0_1, %c0_2] : memref<32x128xbf16, #tpu.memory_space<vmem>>, vector<32x128xbf16>
    %cst = arith.constant dense<0.000000e+00> : vector<8x128xf32>
    %3 = tpu.matmul %1, %2, %cst {dimension_numbers = #tpu.dot_dimension_numbers<[1], [0], [0], [1], [0, 0, 1, 1], [], []>} : vector<8x32xbf16>, vector<32x128xbf16>, vector<8x128xf32> -> vector<8x128xf32>
    %c0_3 = arith.constant 0 : index
    %c0_4 = arith.constant 0 : index
    %4 = vector.load %arg3[%c0_3, %c0_4] : memref<1x128xf32, #tpu.memory_space<vmem>>, vector<1x128xf32>
    %5 = vector.broadcast %4 : vector<1x128xf32> to vector<8x128xf32>
    %6 = arith.addf %3, %5 : vector<8x128xf32>
    %cst_5 = arith.constant 0.000000e+00 : f32
    %7 = vector.broadcast %cst_5 : f32 to vector<8x128xf32>
    %8 = arith.maximumf %6, %7 : vector<8x128xf32>
    %9 = arith.truncf %8 : vector<8x128xf32> to vector<8x128xbf16>
    %c0_6 = arith.constant 0 : index
    %c0_7 = arith.constant 0 : index
    %10 = vector.load %arg4[%c0_6, %c0_7] : memref<128x128xbf16, #tpu.memory_space<vmem>>, vector<128x128xbf16>
    %cst_8 = arith.constant dense<0.000000e+00> : vector<8x128xf32>
    %11 = tpu.matmul %9, %10, %cst_8 {dimension_numbers = #tpu.dot_dimension_numbers<[1], [0], [0], [1], [0, 0, 1, 1], [], []>} : vector<8x128xbf16>, vector<128x128xbf16>, vector<8x128xf32> -> vector<8x128xf32>
    %c0_9 = arith.constant 0 : index
    %c0_10 = arith.constant 0 : index
    %12 = vector.load %arg5[%c0_9, %c0_10] : memref<1x128xf32, #tpu.memory_space<vmem>>, vector<1x128xf32>
    %13 = vector.broadcast %12 : vector<1x128xf32> to vector<8x128xf32>
    %14 = arith.addf %11, %13 : vector<8x128xf32>
    %cst_11 = arith.constant 0.000000e+00 : f32
    %15 = vector.broadcast %cst_11 : f32 to vector<8x128xf32>
    %16 = arith.maximumf %14, %15 : vector<8x128xf32>
    %17 = arith.truncf %16 : vector<8x128xf32> to vector<8x128xbf16>
    %c0_12 = arith.constant 0 : index
    %c0_13 = arith.constant 0 : index
    %18 = vector.load %arg6[%c0_12, %c0_13] : memref<128x1024xbf16, #tpu.memory_space<vmem>>, vector<128x512xbf16>
    %cst_14 = arith.constant dense<0.000000e+00> : vector<8x512xf32>
    %19 = tpu.matmul %17, %18, %cst_14 {dimension_numbers = #tpu.dot_dimension_numbers<[1], [0], [0], [1], [0, 0, 1, 1], [], []>} : vector<8x128xbf16>, vector<128x512xbf16>, vector<8x512xf32> -> vector<8x512xf32>
    %c0_15 = arith.constant 0 : index
    %c0_16 = arith.constant 0 : index
    %20 = vector.load %arg7[%c0_15, %c0_16] : memref<1x1024xf32, #tpu.memory_space<vmem>>, vector<1x512xf32>
    %21 = vector.broadcast %20 : vector<1x512xf32> to vector<8x512xf32>
    %22 = arith.addf %19, %21 : vector<8x512xf32>
    %23 = arith.negf %22 : vector<8x512xf32>
    %24 = math.exp %23 : vector<8x512xf32>
    %cst_17 = arith.constant 1.000000e+00 : f32
    %25 = vector.broadcast %cst_17 : f32 to vector<8x512xf32>
    %26 = arith.addf %25, %24 : vector<8x512xf32>
    %27 = arith.divf %25, %26 : vector<8x512xf32>
    %c0_18 = arith.constant 0 : index
    %c0_19 = arith.constant 0 : index
    %28 = vector.load %arg8[%c0_18, %c0_19] : memref<8x1024xf32, #tpu.memory_space<vmem>>, vector<8x512xf32>
    tpu.vector_store %arg8[%c0_18, %c0_19], %27 {strides = array<i32>} : memref<8x1024xf32, #tpu.memory_space<vmem>>, vector<8x512xf32>,
    %c0_20 = arith.constant 0 : index
    %c512 = arith.constant 512 : index
    %29 = vector.load %arg6[%c0_20, %c512] : memref<128x1024xbf16, #tpu.memory_space<vmem>>, vector<128x512xbf16>
    %cst_21 = arith.constant dense<0.000000e+00> : vector<8x512xf32>
    %30 = tpu.matmul %17, %29, %cst_21 {dimension_numbers = #tpu.dot_dimension_numbers<[1], [0], [0], [1], [0, 0, 1, 1], [], []>} : vector<8x128xbf16>, vector<128x512xbf16>, vector<8x512xf32> -> vector<8x512xf32>
    %c0_22 = arith.constant 0 : index
    %c512_23 = arith.constant 512 : index
    %31 = vector.load %arg7[%c0_22, %c512_23] : memref<1x1024xf32, #tpu.memory_space<vmem>>, vector<1x512xf32>
    %32 = vector.broadcast %31 : vector<1x512xf32> to vector<8x512xf32>
    %33 = arith.addf %30, %32 : vector<8x512xf32>
    %34 = arith.negf %33 : vector<8x512xf32>
    %35 = math.exp %34 : vector<8x512xf32>
    %cst_24 = arith.constant 1.000000e+00 : f32
    %36 = vector.broadcast %cst_24 : f32 to vector<8x512xf32>
    %37 = arith.addf %36, %35 : vector<8x512xf32>
    %38 = arith.divf %36, %37 : vector<8x512xf32>
    %c0_25 = arith.constant 0 : index
    %c512_26 = arith.constant 512 : index
    %39 = vector.load %arg8[%c0_25, %c512_26] : memref<8x1024xf32, #tpu.memory_space<vmem>>, vector<8x512xf32>
    tpu.vector_store %arg8[%c0_25, %c512_26], %38 {strides = array<i32>} : memref<8x1024xf32, #tpu.memory_space<vmem>>, vector<8x512xf32>,
    return
  }
  func.func @transform_0(%arg0: i32) -> (i32, i32) {
    %c0_i32 = arith.constant 0 : i32
    %c0_i32_0 = arith.constant 0 : i32
    return %arg0, %c0_i32 : i32, i32
  }
  func.func @transform_1(%arg0: i32) -> (i32, i32) {
    %c0_i32 = arith.constant 0 : i32
    %c0_i32_0 = arith.constant 0 : i32
    %c0_i32_1 = arith.constant 0 : i32
    return %c0_i32, %c0_i32_0 : i32, i32
  }
  func.func @transform_2(%arg0: i32) -> (i32, i32) {
    %c0_i32 = arith.constant 0 : i32
    %c0_i32_0 = arith.constant 0 : i32
    %c0_i32_1 = arith.constant 0 : i32
    return %c0_i32, %c0_i32_0 : i32, i32
  }
  func.func @transform_3(%arg0: i32) -> (i32, i32) {
    %c0_i32 = arith.constant 0 : i32
    %c0_i32_0 = arith.constant 0 : i32
    %c0_i32_1 = arith.constant 0 : i32
    return %c0_i32, %c0_i32_0 : i32, i32
  }
  func.func @transform_4(%arg0: i32) -> (i32, i32) {
    %c0_i32 = arith.constant 0 : i32
    %c0_i32_0 = arith.constant 0 : i32
    %c0_i32_1 = arith.constant 0 : i32
    return %c0_i32, %c0_i32_0 : i32, i32
  }
  func.func @transform_5(%arg0: i32) -> (i32, i32) {
    %c0_i32 = arith.constant 0 : i32
    %c0_i32_0 = arith.constant 0 : i32
    %c0_i32_1 = arith.constant 0 : i32
    return %c0_i32, %c0_i32_0 : i32, i32
  }
  func.func @transform_6(%arg0: i32) -> (i32, i32) {
    %c0_i32 = arith.constant 0 : i32
    %c0_i32_0 = arith.constant 0 : i32
    %c0_i32_1 = arith.constant 0 : i32
    return %c0_i32, %c0_i32_0 : i32, i32
  }
  func.func @transform_7(%arg0: i32) -> (i32, i32) {
    %c0_i32 = arith.constant 0 : i32
    %c0_i32_0 = arith.constant 0 : i32
    return %arg0, %c0_i32 : i32, i32
  }
}

</mosaic_0001>

<llo_original>
// kernel: tpu_custom_call.1
$region0: #{tpu_custom_call.1}
  #allocation0 [shape = 'u32[]', space=smem, size = 0x4, offset = 0x4, fixed_abs, tag = 'smem constant byte address 0x4 - core index']
  #allocation1 [shape = 'u32[144,128]{1,0:T(1,128)}', space=vmem, size = 0x12000, scoped, tag = 'internal scratch']
  %s0 = inlined_call_operand.hbm [shape: f32[16,32], index: 0, kind: input, shape index: {}]
  %s1 = inlined_call_operand.hbm [shape: bf16[32,128], index: 1, kind: input, shape index: {}]
  %s2 = inlined_call_operand.vmem [shape: f32[1,128], index: 2, kind: input, shape index: {}]
  %s3 = inlined_call_operand.hbm [shape: bf16[128,128], index: 3, kind: input, shape index: {}]
  %s4 = inlined_call_operand.vmem [shape: f32[1,128], index: 4, kind: input, shape index: {}]
  %s5 = inlined_call_operand.hbm [shape: bf16[128,1024], index: 5, kind: input, shape index: {}]
  %s6 = inlined_call_operand.vmem [shape: f32[1,1024], index: 6, kind: input, shape index: {}]
  %s7 = inlined_call_operand.hbm [shape: f32[16,1024], index: 7, kind: output, shape index: {}]
  %s8 = sld [smem:[#allocation0]]
  $region77: #{tpu_custom_call.1} parent=0
    _
  %s10 = ssub.s32 1, %s8
  %s11 = scalar_select 0, %s10, %s8
  $region1: #{tpu_custom_call.1} parent=0
    #allocation2 [shape = 'u8[8192]{0}', space=vmem, size = 0x2000, scoped, tag = 'input window, operand 0']
    #allocation3 [shape = 's32[2]{0}', space=sflag, size = 0x8, scoped, tag = 'scoped memory for tpu_custom_call.1']
    #allocation4 [shape = 's32[2]{0}', space=sflag, size = 0x8, scoped, tag = 'scoped memory for tpu_custom_call.1']
    #allocation5 [shape = 'u8[8192]{0}', space=vmem, size = 0x2000, scoped, tag = 'input window, operand 1, single buffered']
    #allocation6 [shape = 's32[1]{0}', space=sflag, size = 0x4, scoped, tag = 'scoped memory for tpu_custom_call.1']
    #allocation7 [shape = 'u8[32768]{0}', space=vmem, size = 0x8000, scoped, tag = 'input window, operand 3, single buffered']
    #allocation8 [shape = 'u8[262144]{0}', space=vmem, size = 0x40000, scoped, tag = 'input window, operand 5, single buffered']
    #allocation9 [shape = 's32[1]{0}', space=sflag, size = 0x4, scoped, tag = 'scoped memory for tpu_custom_call.1']
    #allocation10 [shape = 'u8[65536]{0}', space=vmem, size = 0x10000, scoped, tag = 'output window, operand 0']
    %12 = vsyncpa [#allocation3], 0
    %s13 = scalar_lea.sflag [#allocation3], 1
    %14 = vsyncpa %s13, 0
    %15 = vsyncpa [#allocation6], 0
    %16 = vsyncpa [#allocation9], 0
    %17 = vsyncpa [#allocation4], 0
    %s18 = scalar_lea.sflag [#allocation4], 1
    %19 = vsyncpa %s18, 0
    loop: start=0, step=1, limit=4
    $region2: #{tpu_custom_call.1} parent=1 // loop_pre_header
      _
    $region3: #{tpu_custom_call.1} parent=1 // loop_header
      %s21 = sphi 0, %s25
      %p22 = scmp.ge.s32.totalorder %s21, 4
      %s31 = sphi 0, %s33
      %s34 = sphi 0, %s31
      %s35 = sphi 0, %s34
      %s51 = sphi 0, %s35
      %s55 = sphi 0, %s55
      %s57 = sphi 0, %s55
      %s58 = sphi 0, %s57
      %s72 = sphi 0, %s58
      %s76 = sphi 0, %s76
      %s78 = sphi 0, %s76
      %s79 = sphi 0, %s78
      %s93 = sphi 0, %s79
      %s97 = sphi 0, %s97
      %s99 = sphi 0, %s97
      %s100 = sphi 0, %s99
      %s114 = sphi 0, %s100
      %s118 = sphi 0, %s118
      %s120 = sphi 0, %s118
      %s121 = sphi 0, %s120
      %s135 = sphi 0, %s121
      %s139 = sphi 0, %s139
      %s141 = sphi 0, %s139
      %s142 = sphi 0, %s141
      %s156 = sphi 0, %s142
      %s160 = sphi 0, %s160
      %s162 = sphi 0, %s160
      %s163 = sphi 0, %s162
      %s177 = sphi 0, %s163
      %s183 = sphi 0, %s185
      %s186 = sphi 0, %s183
      %s187 = sphi 0, %s186
      %s203 = sphi 0, %s187
    $region4: #{tpu_custom_call.1} parent=1 // loop_header_branch
      %24 = sbr.rel (%p22) target = $region8
    $region5: #{tpu_custom_call.1} parent=1 // loop_body
      %s26 = ssub.s32 %s21, 1
      %s27 = ssub.s32 %s21, 2
      %s28 = sadd.s32 %s21, 1
      %s29 = ssub.s32 %s21, %s28
      %p30 = scmp.eq.s32.totalorder %s29, 0
      %s32 = sadd.s32 %s31, 1
      %s33 = scalar_select %p30, %s31, %s32
      %p36 = pneg %p30
      %p37 = scmp.eq.s32.totalorder %s21, 1
      %p38 = por %p36, %p37
      %p39 = scmp.ne.s32.totalorder %s31, %s34
      %p40 = scmp.eq.s32.totalorder %s21, 0
      %p41 = por %p39, %p40
      %p42 = scmp.ne.s32.totalorder %s31, %s34
      %p43 = scmp.eq.s32.totalorder %s26, 1
      %p44 = por %p42, %p43
      %p45 = scmp.ne.s32.totalorder %s34, %s35
      %p46 = scmp.eq.s32.totalorder %s26, 0
      %p47 = por %p45, %p46
      %p48 = scmp.ne.s32.totalorder %s34, %s35
      %p49 = scmp.eq.s32.totalorder %s27, 1
      %p50 = por %p48, %p49
      %p52 = scmp.ne.s32.totalorder %s35, %s51
      %p53 = scmp.eq.s32.totalorder %s27, 0
      %p54 = por %p52, %p53
      %s56 = sadd.s32 %s55, 1
      %p59 = scmp.eq.s32.totalorder %s21, 1
      %p60 = scmp.ne.s32.totalorder %s55, %s57
      %p61 = scmp.eq.s32.totalorder %s21, 0
      %p62 = por %p60, %p61
      %p63 = scmp.ne.s32.totalorder %s55, %s57
      %p64 = scmp.eq.s32.totalorder %s26, 1
      %p65 = por %p63, %p64
      %p66 = scmp.ne.s32.totalorder %s57, %s58
      %p67 = scmp.eq.s32.totalorder %s26, 0
      %p68 = por %p66, %p67
      %p69 = scmp.ne.s32.totalorder %s57, %s58
      %p70 = scmp.eq.s32.totalorder %s27, 1
      %p71 = por %p69, %p70
      %p73 = scmp.ne.s32.totalorder %s58, %s72
      %p74 = scmp.eq.s32.totalorder %s27, 0
      %p75 = por %p73, %p74
      %s77 = sadd.s32 %s76, 1
      %p80 = scmp.eq.s32.totalorder %s21, 1
      %p81 = scmp.ne.s32.totalorder %s76, %s78
      %p82 = scmp.eq.s32.totalorder %s21, 0
      %p83 = por %p81, %p82
      %p84 = scmp.ne.s32.totalorder %s76, %s78
      %p85 = scmp.eq.s32.totalorder %s26, 1
      %p86 = por %p84, %p85
      %p87 = scmp.ne.s32.totalorder %s78, %s79
      %p88 = scmp.eq.s32.totalorder %s26, 0
      %p89 = por %p87, %p88
      %p90 = scmp.ne.s32.totalorder %s78, %s79
      %p91 = scmp.eq.s32.totalorder %s27, 1
      %p92 = por %p90, %p91
      %p94 = scmp.ne.s32.totalorder %s79, %s93
      %p95 = scmp.eq.s32.totalorder %s27, 0
      %p96 = por %p94, %p95
      %s98 = sadd.s32 %s97, 1
      %p101 = scmp.eq.s32.totalorder %s21, 1
      %p102 = scmp.ne.s32.totalorder %s97, %s99
      %p103 = scmp.eq.s32.totalorder %s21, 0
      %p104 = por %p102, %p103
      %p105 = scmp.ne.s32.totalorder %s97, %s99
      %p106 = scmp.eq.s32.totalorder %s26, 1
      %p107 = por %p105, %p106
      %p108 = scmp.ne.s32.totalorder %s99, %s100
      %p109 = scmp.eq.s32.totalorder %s26, 0
      %p110 = por %p108, %p109
      %p111 = scmp.ne.s32.totalorder %s99, %s100
      %p112 = scmp.eq.s32.totalorder %s27, 1
      %p113 = por %p111, %p112
      %p115 = scmp.ne.s32.totalorder %s100, %s114
      %p116 = scmp.eq.s32.totalorder %s27, 0
      %p117 = por %p115, %p116
      %s119 = sadd.s32 %s118, 1
      %p122 = scmp.eq.s32.totalorder %s21, 1
      %p123 = scmp.ne.s32.totalorder %s118, %s120
      %p124 = scmp.eq.s32.totalorder %s21, 0
      %p125 = por %p123, %p124
      %p126 = scmp.ne.s32.totalorder %s118, %s120
      %p127 = scmp.eq.s32.totalorder %s26, 1
      %p128 = por %p126, %p127
      %p129 = scmp.ne.s32.totalorder %s120, %s121
      %p130 = scmp.eq.s32.totalorder %s26, 0
      %p131 = por %p129, %p130
      %p132 = scmp.ne.s32.totalorder %s120, %s121
      %p133 = scmp.eq.s32.totalorder %s27, 1
      %p134 = por %p132, %p133
      %p136 = scmp.ne.s32.totalorder %s121, %s135
      %p137 = scmp.eq.s32.totalorder %s27, 0
      %p138 = por %p136, %p137
      %s140 = sadd.s32 %s139, 1
      %p143 = scmp.eq.s32.totalorder %s21, 1
      %p144 = scmp.ne.s32.totalorder %s139, %s141
      %p145 = scmp.eq.s32.totalorder %s21, 0
      %p146 = por %p144, %p145
      %p147 = scmp.ne.s32.totalorder %s139, %s141
      %p148 = scmp.eq.s32.totalorder %s26, 1
      %p149 = por %p147, %p148
      %p150 = scmp.ne.s32.totalorder %s141, %s142
      %p151 = scmp.eq.s32.totalorder %s26, 0
      %p152 = por %p150, %p151
      %p153 = scmp.ne.s32.totalorder %s141, %s142
      %p154 = scmp.eq.s32.totalorder %s27, 1
      %p155 = por %p153, %p154
      %p157 = scmp.ne.s32.totalorder %s142, %s156
      %p158 = scmp.eq.s32.totalorder %s27, 0
      %p159 = por %p157, %p158
      %s161 = sadd.s32 %s160, 1
      %p164 = scmp.eq.s32.totalorder %s21, 1
      %p165 = scmp.ne.s32.totalorder %s160, %s162
      %p166 = scmp.eq.s32.totalorder %s21, 0
      %p167 = por %p165, %p166
      %p168 = scmp.ne.s32.totalorder %s160, %s162
      %p169 = scmp.eq.s32.totalorder %s26, 1
      %p170 = por %p168, %p169
      %p171 = scmp.ne.s32.totalorder %s162, %s163
      %p172 = scmp.eq.s32.totalorder %s26, 0
      %p173 = por %p171, %p172
      %p174 = scmp.ne.s32.totalorder %s162, %s163
      %p175 = scmp.eq.s32.totalorder %s27, 1
      %p176 = por %p174, %p175
      %p178 = scmp.ne.s32.totalorder %s163, %s177
      %p179 = scmp.eq.s32.totalorder %s27, 0
      %p180 = por %p178, %p179
      %s181 = ssub.s32 %s21, %s28
      %p182 = scmp.eq.s32.totalorder %s181, 0
      %s184 = sadd.s32 %s183, 1
      %s185 = scalar_select %p182, %s183, %s184
      %p188 = pneg %p182
      %p189 = scmp.eq.s32.totalorder %s21, 1
      %p190 = por %p188, %p189
      %p191 = scmp.ne.s32.totalorder %s183, %s186
      %p192 = scmp.eq.s32.totalorder %s21, 0
      %p193 = por %p191, %p192
      %p194 = scmp.ne.s32.totalorder %s183, %s186
      %p195 = scmp.eq.s32.totalorder %s26, 1
      %p196 = por %p194, %p195
      %p197 = scmp.ne.s32.totalorder %s186, %s187
      %p198 = scmp.eq.s32.totalorder %s26, 0
      %p199 = por %p197, %p198
      %p200 = scmp.ne.s32.totalorder %s186, %s187
      %p201 = scmp.eq.s32.totalorder %s27, 1
      %p202 = por %p200, %p201
      %p204 = scmp.ne.s32.totalorder %s187, %s203
      %p205 = scmp.eq.s32.totalorder %s27, 0
      %p206 = por %p204, %p205
      %p207 = scmp.le.s32.totalorder 1, %s21
      %p208 = scmp.lt.s32.totalorder %s21, 3
      %p209 = pnand %p207, %p208
      %p210 = pneg %p209
      // Predicated region
      $region9: #{tpu_custom_call.1} parent=5 // pred_check
        _
      $region10: #{tpu_custom_call.1} parent=5 // pred_check_branch
        %212 = sbr.rel (%p209) target = $region12
      $region11: #{tpu_custom_call.1} parent=5 // pred_region
        %s213 = ssub.s32 %s21, 1
        // Predicated region
        $region13: #{tpu_custom_call.1} parent=11 // pred_check
          %p214 = pneg %p68
        $region14: #{tpu_custom_call.1} parent=11 // pred_check_branch
          %216 = sbr.rel (%p214) target = $region16
        $region15: #{tpu_custom_call.1} parent=11 // pred_region
          %s218 = ssub.s32 256, 256
          %219 = vsyncadd [#allocation6], %s218
          %s220 = sshll.u32 [#allocation5], 4
          %s221 = int_to_ptr.vmem [resolvable:$true] %s220
          %226 = dma.hbm_to_vmem [thread:$0]  %s1, 256, %s221, [#allocation6], 64, 64, 4
        $region16: #{tpu_custom_call.1} parent=11 // pred_fallthru
          _
        // Predicated region
        $region17: #{tpu_custom_call.1} parent=11 // pred_check
          %p227 = pneg %p89
        $region18: #{tpu_custom_call.1} parent=11 // pred_check_branch
          %229 = sbr.rel (%p227) target = $region20
        $region19: #{tpu_custom_call.1} parent=11 // pred_region
          _
        $region20: #{tpu_custom_call.1} parent=11 // pred_fallthru
          _
        // Predicated region
        $region21: #{tpu_custom_call.1} parent=11 // pred_check
          %p230 = pneg %p110
        $region22: #{tpu_custom_call.1} parent=11 // pred_check_branch
          %232 = sbr.rel (%p230) target = $region24
        $region23: #{tpu_custom_call.1} parent=11 // pred_region
          %s234 = ssub.s32 1024, 1024
          %235 = vsyncadd [#allocation6], %s234
          %s236 = sshll.u32 [#allocation7], 4
          %s237 = int_to_ptr.vmem [resolvable:$true] %s236
          %242 = dma.hbm_to_vmem [thread:$0]  %s3, 1024, %s237, [#allocation6], 64, 64, 4
        $region24: #{tpu_custom_call.1} parent=11 // pred_fallthru
          _
        // Predicated region
        $region25: #{tpu_custom_call.1} parent=11 // pred_check
          %p243 = pneg %p131
        $region26: #{tpu_custom_call.1} parent=11 // pred_check_branch
          %245 = sbr.rel (%p243) target = $region28
        $region27: #{tpu_custom_call.1} parent=11 // pred_region
          _
        $region28: #{tpu_custom_call.1} parent=11 // pred_fallthru
          _
        // Predicated region
        $region29: #{tpu_custom_call.1} parent=11 // pred_check
          %p246 = pneg %p152
        $region30: #{tpu_custom_call.1} parent=11 // pred_check_branch
          %248 = sbr.rel (%p246) target = $region32
        $region31: #{tpu_custom_call.1} parent=11 // pred_region
          %s250 = ssub.s32 8192, 8192
          %251 = vsyncadd [#allocation9], %s250
          %s252 = sshll.u32 [#allocation8], 4
          %s253 = int_to_ptr.vmem [resolvable:$true] %s252
          %258 = dma.hbm_to_vmem [thread:$0]  %s5, 8192, %s253, [#allocation9], 512, 512, 32
        $region32: #{tpu_custom_call.1} parent=11 // pred_fallthru
          _
        // Predicated region
        $region33: #{tpu_custom_call.1} parent=11 // pred_check
          %p259 = pneg %p173
        $region34: #{tpu_custom_call.1} parent=11 // pred_check_branch
          %261 = sbr.rel (%p259) target = $region36
        $region35: #{tpu_custom_call.1} parent=11 // pred_region
          _
        $region36: #{tpu_custom_call.1} parent=11 // pred_fallthru
          _
      $region12: #{tpu_custom_call.1} parent=5 // pred_fallthru
        _
      %p262 = scmp.lt.s32.totalorder %s21, 2
      // Predicated region
      $region37: #{tpu_custom_call.1} parent=5 // pred_check
        %p263 = pneg %p262
      $region38: #{tpu_custom_call.1} parent=5 // pred_check_branch
        %265 = sbr.rel (%p263) target = $region40
      $region39: #{tpu_custom_call.1} parent=5 // pred_region
        // Predicated region
        $region41: #{tpu_custom_call.1} parent=39 // pred_check
          %p266 = pneg %p41
        $region42: #{tpu_custom_call.1} parent=39 // pred_check_branch
          %268 = sbr.rel (%p266) target = $region44
        $region43: #{tpu_custom_call.1} parent=39 // pred_region
          %s269 = sand.u32 %s31, 1
          %s270 = scalar_lea.sflag [#allocation3], %s269
          %s271 = sand.u32 %s31, 1
          %s272 = smul.addr %s271, 8
          %s273 = scalar_lea.vmem [#allocation2], %s272
          %s275 = ssub.s32 128, 128
          %276 = vsyncadd %s270, %s275
          %s277 = smul.addr %s21, 128
          %s278 = scalar_lea.hbm %s0, %s277
          %s280 = sshll.u32 %s273, 4
          %s281 = int_to_ptr.vmem [resolvable:$true] %s280
          %283 = dma.hbm_to_vmem [thread:$0]  %s278, 128, %s281, %s270
        $region44: #{tpu_custom_call.1} parent=39 // pred_fallthru
          _
      $region40: #{tpu_custom_call.1} parent=5 // pred_fallthru
        _
      %p284 = scmp.le.s32.totalorder 1, %s21
      %p285 = scmp.lt.s32.totalorder %s21, 3
      %p286 = pnand %p284, %p285
      %p287 = pneg %p286
      // Predicated region
      $region45: #{tpu_custom_call.1} parent=5 // pred_check
        _
      $region46: #{tpu_custom_call.1} parent=5 // pred_check_branch
        %289 = sbr.rel (%p286) target = $region48
      $region47: #{tpu_custom_call.1} parent=5 // pred_region
        %s290 = ssub.s32 %s21, 1
        %s291 = sand.u32 %s34, 1
        %s292 = scalar_lea.sflag [#allocation3], %s291
        %s293 = sand.u32 %s34, 1
        %s294 = smul.addr %s293, 8
        %s295 = scalar_lea.vmem [#allocation2], %s294
        // Predicated region
        $region49: #{tpu_custom_call.1} parent=47 // pred_check
          %p296 = pneg %p47
        $region50: #{tpu_custom_call.1} parent=47 // pred_check_branch
          %298 = sbr.rel (%p296) target = $region52
        $region51: #{tpu_custom_call.1} parent=47 // pred_region
          %299 = dma.done %s292, 128
        $region52: #{tpu_custom_call.1} parent=47 // pred_fallthru
          _
        // Predicated region
        $region53: #{tpu_custom_call.1} parent=47 // pred_check
          %p300 = pneg %p68
        $region54: #{tpu_custom_call.1} parent=47 // pred_check_branch
          %302 = sbr.rel (%p300) target = $region56
        $region55: #{tpu_custom_call.1} parent=47 // pred_region
          %303 = dma.done [#allocation6], 256
        $region56: #{tpu_custom_call.1} parent=47 // pred_fallthru
          _
        // Predicated region
        $region57: #{tpu_custom_call.1} parent=47 // pred_check
          %p304 = pneg %p110
        $region58: #{tpu_custom_call.1} parent=47 // pred_check_branch
          %306 = sbr.rel (%p304) target = $region60
        $region59: #{tpu_custom_call.1} parent=47 // pred_region
          %307 = dma.done [#allocation6], 1024
        $region60: #{tpu_custom_call.1} parent=47 // pred_fallthru
          _
        // Predicated region
        $region61: #{tpu_custom_call.1} parent=47 // pred_check
          %p308 = pneg %p152
        $region62: #{tpu_custom_call.1} parent=47 // pred_check_branch
          %310 = sbr.rel (%p308) target = $region64
        $region63: #{tpu_custom_call.1} parent=47 // pred_region
          %311 = dma.done [#allocation9], 8192
        $region64: #{tpu_custom_call.1} parent=47 // pred_fallthru
          _
        %s312 = sand.u32 %s34, 1
        %s313 = scalar_lea.sflag [#allocation3], %s312
        %s314 = sand.u32 %s34, 1
        %s315 = smul.addr %s314, 8
        %s316 = scalar_lea.vmem [#allocation2], %s315
        %p317 = pneg %p47
        %p318 = pneg %p44
        %p319 = pneg %p68
        %p320 = pneg %p65
        %p321 = pneg %p89
        %p322 = pneg %p86
        %p323 = pneg %p110
        %p324 = pneg %p107
        %p325 = pneg %p131
        %p326 = pneg %p128
        %p327 = pneg %p152
        %p328 = pneg %p149
        %p329 = pneg %p173
        %p330 = pneg %p170
        %p331 = pneg %p199
        %p332 = pneg %p196
        %s333 = sand.u32 %s186, 1
        %s334 = scalar_lea.sflag [#allocation4], %s333
        %s335 = sand.u32 %s186, 1
        %s336 = smul.addr %s335, 64
        %s337 = scalar_lea.vmem [#allocation10], %s336
        %v339 = vld [vmem:[%s295] sm:$0xff]
        %v340 = vpack.c.bf16 %v339, %v339
        %v341 = vld [vmem:[#allocation5] sm:$0xf]
        %v342 = vld [vmem:[#allocation5 + $0x4] sm:$0xf]
        %v343 = vld [vmem:[#allocation5 + $0x8] sm:$0xf]
        %v344 = vld [vmem:[#allocation5 + $0xc] sm:$0xf]
        %v345 = vld [vmem:[%s2] sm:$0x1]
        %v347 = vlaneseq
        %v348 = vshrl.u32 %v347, 7
        %v349 = vsub.s32 0, %v348
        %v350 = vrot.slane %v345, %v349
        %v356 = vunpack.c.l.b16 %v341
        %v357 = vunpack.c.l.b16 %v342
        %v358 = vunpack.c.l.b16 %v343
        %v359 = vunpack.c.l.b16 %v344
        %v360 = vpack.c.b16 %v357, %v356
        %v361 = vpack.c.b16 %v359, %v358
        %vm364 = vcmask 261120
        %v366 = vsel %vm364, %v340, 0
        %368 = vmatprep.subr.bf16.mxu0 0
        %369 = vmatpush1.bf16.msra.mxu0 0
        %370 = vmatprep.subr.bf16.mxu0 0
        %371 = vmatpush1.bf16.msra.mxu0 0
        %372 = vmatprep.subr.bf16.mxu0 0
        %373 = vmatpush1.bf16.msra.mxu0 0
        %374 = vmatprep.subr.bf16.mxu0 0
        %375 = vmatpush1.bf16.msra.mxu0 0
        %376 = vmatprep.subr.bf16.mxu0 0
        %377 = vmatpush1.bf16.msra.mxu0 0
        %378 = vmatprep.subr.bf16.mxu0 0
        %379 = vmatpush1.bf16.msra.mxu0 0
        %380 = vmatprep.subr.bf16.mxu0 0
        %381 = vmatpush1.bf16.msra.mxu0 %v361
        %382 = vmatprep.subr.bf16.mxu0 0
        %383 = vmatpush1.bf16.msra.mxu0 %v360
        %384 = vmatprep.subr.bf16.mxu0 0
        %385 = vmatpush2.bf16.msra.mxu0 0
        %386 = vmatprep.subr.bf16.mxu0 0
        %387 = vmatpush2.bf16.msra.mxu0 0
        %388 = vmatprep.subr.bf16.mxu0 0
        %389 = vmatpush2.bf16.msra.mxu0 0
        %390 = vmatprep.subr.bf16.mxu0 0
        %391 = vmatpush2.bf16.msra.mxu0 0
        %392 = vmatprep.subr.bf16.mxu0 0
        %393 = vmatpush2.bf16.msra.mxu0 0
        %394 = vmatprep.subr.bf16.mxu0 0
        %395 = vmatpush2.bf16.msra.mxu0 0
        %396 = vmatprep.subr.bf16.mxu0 0
        %397 = vmatpush2.bf16.msra.mxu0 0
        %398 = vmatprep.subr.bf16.mxu0 0
        %399 = vmatpush2.bf16.msra.mxu0 0
        %400 = vmatprep.mubr.bf16.mxu0 0
        %401 = vmatmul.mubr.bf16.gmra.mxu0 %v366
        %v402 = vpop.f32.mrf.mxu0
        %v403 = vadd.f32 %v350, %v402
        %v404 = vpop.f32.mrf.mxu0
        %v405 = vpop.f32.mrf.mxu0
        %v406 = vpop.f32.mrf.mxu0
        %407 = vdwg.mxu0
        %v408 = vmax.f32 %v403, 0.0
        %v409 = vpack.c.bf16 %v408, %v408
        %v410 = vld [vmem:[#allocation7] sm:$0xf]
        %v411 = vld [vmem:[#allocation7 + $0x4] sm:$0xf]
        %v412 = vld [vmem:[#allocation7 + $0x8] sm:$0xf]
        %v413 = vld [vmem:[#allocation7 + $0xc] sm:$0xf]
        %v414 = vld [vmem:[#allocation7 + $0x10] sm:$0xf]
        %v415 = vld [vmem:[#allocation7 + $0x14] sm:$0xf]
        %v416 = vld [vmem:[#allocation7 + $0x18] sm:$0xf]
        %v417 = vld [vmem:[#allocation7 + $0x1c] sm:$0xf]
        %v418 = vld [vmem:[#allocation7 + $0x20] sm:$0xf]
        %v419 = vld [vmem:[#allocation7 + $0x24] sm:$0xf]
        %v420 = vld [vmem:[#allocation7 + $0x28] sm:$0xf]
        %v421 = vld [vmem:[#allocation7 + $0x2c] sm:$0xf]
        %v422 = vld [vmem:[#allocation7 + $0x30] sm:$0xf]
        %v423 = vld [vmem:[#allocation7 + $0x34] sm:$0xf]
        %v424 = vld [vmem:[#allocation7 + $0x38] sm:$0xf]
        %v425 = vld [vmem:[#allocation7 + $0x3c] sm:$0xf]
        %v426 = vld [vmem:[%s4] sm:$0x1]
        %v428 = vlaneseq
        %v429 = vshrl.u32 %v428, 7
        %v430 = vsub.s32 0, %v429
        %v431 = vrot.slane %v426, %v430
        %v449 = vunpack.c.l.b16 %v410
        %v450 = vunpack.c.l.b16 %v411
        %v451 = vunpack.c.l.b16 %v412
        %v452 = vunpack.c.l.b16 %v413
        %v453 = vunpack.c.l.b16 %v414
        %v454 = vunpack.c.l.b16 %v415
        %v455 = vunpack.c.l.b16 %v416
        %v456 = vunpack.c.l.b16 %v417
        %v457 = vunpack.c.l.b16 %v418
        %v458 = vunpack.c.l.b16 %v419
        %v459 = vunpack.c.l.b16 %v420
        %v460 = vunpack.c.l.b16 %v421
        %v461 = vunpack.c.l.b16 %v422
        %v462 = vunpack.c.l.b16 %v423
        %v463 = vunpack.c.l.b16 %v424
        %v464 = vunpack.c.l.b16 %v425
        %v465 = vpack.c.b16 %v450, %v449
        %v466 = vpack.c.b16 %v452, %v451
        %v467 = vpack.c.b16 %v454, %v453
        %v468 = vpack.c.b16 %v456, %v455
        %v469 = vpack.c.b16 %v458, %v457
        %v470 = vpack.c.b16 %v460, %v459
        %v471 = vpack.c.b16 %v462, %v461
        %v472 = vpack.c.b16 %v464, %v463
        %481 = vmatprep.subr.bf16.mxu0 0
        %482 = vmatpush1.bf16.msra.mxu0 %v472
        %483 = vmatprep.subr.bf16.mxu0 0
        %484 = vmatpush1.bf16.msra.mxu0 %v471
        %485 = vmatprep.subr.bf16.mxu0 0
        %486 = vmatpush1.bf16.msra.mxu0 %v470
        %487 = vmatprep.subr.bf16.mxu0 0
        %488 = vmatpush1.bf16.msra.mxu0 %v469
        %489 = vmatprep.subr.bf16.mxu0 0
        %490 = vmatpush1.bf16.msra.mxu0 %v468
        %491 = vmatprep.subr.bf16.mxu0 0
        %492 = vmatpush1.bf16.msra.mxu0 %v467
        %493 = vmatprep.subr.bf16.mxu0 0
        %494 = vmatpush1.bf16.msra.mxu0 %v466
        %495 = vmatprep.subr.bf16.mxu0 0
        %496 = vmatpush1.bf16.msra.mxu0 %v465
        %497 = vmatprep.subr.bf16.mxu0 0
        %498 = vmatpush2.bf16.msra.mxu0 0
        %499 = vmatprep.subr.bf16.mxu0 0
        %500 = vmatpush2.bf16.msra.mxu0 0
        %501 = vmatprep.subr.bf16.mxu0 0
        %502 = vmatpush2.bf16.msra.mxu0 0
        %503 = vmatprep.subr.bf16.mxu0 0
        %504 = vmatpush2.bf16.msra.mxu0 0
        %505 = vmatprep.subr.bf16.mxu0 0
        %506 = vmatpush2.bf16.msra.mxu0 0
        %507 = vmatprep.subr.bf16.mxu0 0
        %508 = vmatpush2.bf16.msra.mxu0 0
        %509 = vmatprep.subr.bf16.mxu0 0
        %510 = vmatpush2.bf16.msra.mxu0 0
        %511 = vmatprep.subr.bf16.mxu0 0
        %512 = vmatpush2.bf16.msra.mxu0 0
        %513 = vmatprep.mubr.bf16.mxu0 0
        %514 = vmatmul.mubr.bf16.gmra.mxu0 %v409
        %v515 = vpop.f32.mrf.mxu0
        %v516 = vadd.f32 %v431, %v515
        %v517 = vpop.f32.mrf.mxu0
        %v518 = vpop.f32.mrf.mxu0
        %v519 = vpop.f32.mrf.mxu0
        %520 = vdwg.mxu0
        %v521 = vmax.f32 %v516, 0.0
        %v522 = vpack.c.bf16 %v521, %v521
        %v523 = vld [vmem:[#allocation8] sm:$0xff]
        %v524 = vld [vmem:[#allocation8 + $0x8] sm:$0xff]
        %v525 = vld [vmem:[#allocation8 + $0x20] sm:$0xff]
        %v526 = vld [vmem:[#allocation8 + $0x28] sm:$0xff]
        %v527 = vld [vmem:[#allocation8 + $0x40] sm:$0xff]
        %v528 = vld [vmem:[#allocation8 + $0x48] sm:$0xff]
        %v529 = vld [vmem:[#allocation8 + $0x60] sm:$0xff]
        %v530 = vld [vmem:[#allocation8 + $0x68] sm:$0xff]
        %v531 = vld [vmem:[#allocation8 + $0x80] sm:$0xff]
        %v532 = vld [vmem:[#allocation8 + $0x88] sm:$0xff]
        %v533 = vld [vmem:[#allocation8 + $0xa0] sm:$0xff]
        %v534 = vld [vmem:[#allocation8 + $0xa8] sm:$0xff]
        %v535 = vld [vmem:[#allocation8 + $0xc0] sm:$0xff]
        %v536 = vld [vmem:[#allocation8 + $0xc8] sm:$0xff]
        %v537 = vld [vmem:[#allocation8 + $0xe0] sm:$0xff]
        %v538 = vld [vmem:[#allocation8 + $0xe8] sm:$0xff]
        %v539 = vld [vmem:[#allocation8 + $0x100] sm:$0xff]
        %v540 = vld [vmem:[#allocation8 + $0x108] sm:$0xff]
        %v541 = vld [vmem:[#allocation8 + $0x120] sm:$0xff]
        %v542 = vld [vmem:[#allocation8 + $0x128] sm:$0xff]
        %v543 = vld [vmem:[#allocation8 + $0x140] sm:$0xff]
        %v544 = vld [vmem:[#allocation8 + $0x148] sm:$0xff]
        %v545 = vld [vmem:[#allocation8 + $0x160] sm:$0xff]
        %v546 = vld [vmem:[#allocation8 + $0x168] sm:$0xff]
        %v547 = vld [vmem:[#allocation8 + $0x180] sm:$0xff]
        %v548 = vld [vmem:[#allocation8 + $0x188] sm:$0xff]
        %v549 = vld [vmem:[#allocation8 + $0x1a0] sm:$0xff]
        %v550 = vld [vmem:[#allocation8 + $0x1a8] sm:$0xff]
        %v551 = vld [vmem:[#allocation8 + $0x1c0] sm:$0xff]
        %v552 = vld [vmem:[#allocation8 + $0x1c8] sm:$0xff]
        %v553 = vld [vmem:[#allocation8 + $0x1e0] sm:$0xff]
        %v554 = vld [vmem:[#allocation8 + $0x1e8] sm:$0xff]
        %v555 = vld [vmem:[%s6] sm:$0xf]
        %v557 = vlaneseq
        %v558 = vshrl.u32 %v557, 7
        %v559 = vsub.s32 0, %v558
        %v560 = vrot.slane %v555, %v559
        %v561 = vlaneseq
        %v562 = vshrl.u32 %v561, 7
        %v563 = vsub.s32 1, %v562
        %v564 = vrot.slane %v555, %v563
        %v565 = vlaneseq
        %v566 = vshrl.u32 %v565, 7
        %v567 = vsub.s32 2, %v566
        %v568 = vrot.slane %v555, %v567
        %v569 = vlaneseq
        %v570 = vshrl.u32 %v569, 7
        %v571 = vsub.s32 3, %v570
        %v572 = vrot.slane %v555, %v571
        %v609 = vunpack.c.l.b16 %v523
        %v610 = vunpack.c.h.b16 %v523
        %v611 = vunpack.c.l.b16 %v524
        %v612 = vunpack.c.h.b16 %v524
        %v613 = vunpack.c.l.b16 %v525
        %v614 = vunpack.c.h.b16 %v525
        %v615 = vunpack.c.l.b16 %v526
        %v616 = vunpack.c.h.b16 %v526
        %v617 = vunpack.c.l.b16 %v527
        %v618 = vunpack.c.h.b16 %v527
        %v619 = vunpack.c.l.b16 %v528
        %v620 = vunpack.c.h.b16 %v528
        %v621 = vunpack.c.l.b16 %v529
        %v622 = vunpack.c.h.b16 %v529
        %v623 = vunpack.c.l.b16 %v530
        %v624 = vunpack.c.h.b16 %v530
        %v625 = vunpack.c.l.b16 %v531
        %v626 = vunpack.c.h.b16 %v531
        %v627 = vunpack.c.l.b16 %v532
        %v628 = vunpack.c.h.b16 %v532
        %v629 = vunpack.c.l.b16 %v533
        %v630 = vunpack.c.h.b16 %v533
        %v631 = vunpack.c.l.b16 %v534
        %v632 = vunpack.c.h.b16 %v534
        %v633 = vunpack.c.l.b16 %v535
        %v634 = vunpack.c.h.b16 %v535
        %v635 = vunpack.c.l.b16 %v536
        %v636 = vunpack.c.h.b16 %v536
        %v637 = vunpack.c.l.b16 %v537
        %v638 = vunpack.c.h.b16 %v537
        %v639 = vunpack.c.l.b16 %v538
        %v640 = vunpack.c.h.b16 %v538
        %v641 = vunpack.c.l.b16 %v539
        %v642 = vunpack.c.h.b16 %v539
        %v643 = vunpack.c.l.b16 %v540
        %v644 = vunpack.c.h.b16 %v540
        %v645 = vunpack.c.l.b16 %v541
        %v646 = vunpack.c.h.b16 %v541
        %v647 = vunpack.c.l.b16 %v542
        %v648 = vunpack.c.h.b16 %v542
        %v649 = vunpack.c.l.b16 %v543
        %v650 = vunpack.c.h.b16 %v543
        %v651 = vunpack.c.l.b16 %v544
        %v652 = vunpack.c.h.b16 %v544
        %v653 = vunpack.c.l.b16 %v545
        %v654 = vunpack.c.h.b16 %v545
        %v655 = vunpack.c.l.b16 %v546
        %v656 = vunpack.c.h.b16 %v546
        %v657 = vunpack.c.l.b16 %v547
        %v658 = vunpack.c.h.b16 %v547
        %v659 = vunpack.c.l.b16 %v548
        %v660 = vunpack.c.h.b16 %v548
        %v661 = vunpack.c.l.b16 %v549
        %v662 = vunpack.c.h.b16 %v549
        %v663 = vunpack.c.l.b16 %v550
        %v664 = vunpack.c.h.b16 %v550
        %v665 = vunpack.c.l.b16 %v551
        %v666 = vunpack.c.h.b16 %v551
        %v667 = vunpack.c.l.b16 %v552
        %v668 = vunpack.c.h.b16 %v552
        %v669 = vunpack.c.l.b16 %v553
        %v670 = vunpack.c.h.b16 %v553
        %v671 = vunpack.c.l.b16 %v554
        %v672 = vunpack.c.h.b16 %v554
        %v673 = vpack.c.b16 %v613, %v609
        %v674 = vpack.c.b16 %v614, %v610
        %v675 = vpack.c.b16 %v615, %v611
        %v676 = vpack.c.b16 %v616, %v612
        %v677 = vpack.c.b16 %v621, %v617
        %v678 = vpack.c.b16 %v622, %v618
        %v679 = vpack.c.b16 %v623, %v619
        %v680 = vpack.c.b16 %v624, %v620
        %v681 = vpack.c.b16 %v629, %v625
        %v682 = vpack.c.b16 %v630, %v626
        %v683 = vpack.c.b16 %v631, %v627
        %v684 = vpack.c.b16 %v632, %v628
        %v685 = vpack.c.b16 %v637, %v633
        %v686 = vpack.c.b16 %v638, %v634
        %v687 = vpack.c.b16 %v639, %v635
        %v688 = vpack.c.b16 %v640, %v636
        %v689 = vpack.c.b16 %v645, %v641
        %v690 = vpack.c.b16 %v646, %v642
        %v691 = vpack.c.b16 %v647, %v643
        %v692 = vpack.c.b16 %v648, %v644
        %v693 = vpack.c.b16 %v653, %v649
        %v694 = vpack.c.b16 %v654, %v650
        %v695 = vpack.c.b16 %v655, %v651
        %v696 = vpack.c.b16 %v656, %v652
        %v697 = vpack.c.b16 %v661, %v657
        %v698 = vpack.c.b16 %v662, %v658
        %v699 = vpack.c.b16 %v663, %v659
        %v700 = vpack.c.b16 %v664, %v660
        %v701 = vpack.c.b16 %v669, %v665
        %v702 = vpack.c.b16 %v670, %v666
        %v703 = vpack.c.b16 %v671, %v667
        %v704 = vpack.c.b16 %v672, %v668
        %737 = vmatprep.subr.bf16.mxu0 %v702
        %738 = vmatpush1.bf16.msra.mxu0 %v701
        %739 = vmatprep.subr.bf16.mxu0 %v698
        %740 = vmatpush1.bf16.msra.mxu0 %v697
        %741 = vmatprep.subr.bf16.mxu0 %v694
        %742 = vmatpush1.bf16.msra.mxu0 %v693
        %743 = vmatprep.subr.bf16.mxu0 %v690
        %744 = vmatpush1.bf16.msra.mxu0 %v689
        %745 = vmatprep.subr.bf16.mxu0 %v686
        %746 = vmatpush1.bf16.msra.mxu0 %v685
        %747 = vmatprep.subr.bf16.mxu0 %v682
        %748 = vmatpush1.bf16.msra.mxu0 %v681
        %749 = vmatprep.subr.bf16.mxu0 %v678
        %750 = vmatpush1.bf16.msra.mxu0 %v677
        %751 = vmatprep.subr.bf16.mxu0 %v674
        %752 = vmatpush1.bf16.msra.mxu0 %v673
        %753 = vmatprep.subr.bf16.mxu0 0
        %754 = vmatpush2.bf16.msra.mxu0 0
        %755 = vmatprep.subr.bf16.mxu0 0
        %756 = vmatpush2.bf16.msra.mxu0 0
        %757 = vmatprep.subr.bf16.mxu0 0
        %758 = vmatpush2.bf16.msra.mxu0 0
        %759 = vmatprep.subr.bf16.mxu0 0
        %760 = vmatpush2.bf16.msra.mxu0 0
        %761 = vmatprep.subr.bf16.mxu0 0
        %762 = vmatpush2.bf16.msra.mxu0 0
        %763 = vmatprep.subr.bf16.mxu0 0
        %764 = vmatpush2.bf16.msra.mxu0 0
        %765 = vmatprep.subr.bf16.mxu0 0
        %766 = vmatpush2.bf16.msra.mxu0 0
        %767 = vmatprep.subr.bf16.mxu0 0
        %768 = vmatpush2.bf16.msra.mxu0 0
        %769 = vmatprep.mubr.bf16.mxu0 0
        %770 = vmatmul.mubr.bf16.gmra.mxu0 %v522
        %v771 = vpop.f32.mrf.mxu0
        %v772 = vadd.f32 %v560, %v771
        %v773 = vpop.f32.mrf.mxu0
        %v774 = vadd.f32 %v564, %v773
        %v775 = vpop.f32.mrf.mxu0
        %v776 = vpop.f32.mrf.mxu0
        %777 = vdwg.mxu0
        %778 = vmatprep.subr.bf16.mxu0 %v704
        %779 = vmatpush1.bf16.msra.mxu0 %v703
        %780 = vmatprep.subr.bf16.mxu0 %v700
        %781 = vmatpush1.bf16.msra.mxu0 %v699
        %782 = vmatprep.subr.bf16.mxu0 %v696
        %783 = vmatpush1.bf16.msra.mxu0 %v695
        %784 = vmatprep.subr.bf16.mxu0 %v692
        %785 = vmatpush1.bf16.msra.mxu0 %v691
        %786 = vmatprep.subr.bf16.mxu0 %v688
        %787 = vmatpush1.bf16.msra.mxu0 %v687
        %788 = vmatprep.subr.bf16.mxu0 %v684
        %789 = vmatpush1.bf16.msra.mxu0 %v683
        %790 = vmatprep.subr.bf16.mxu0 %v680
        %791 = vmatpush1.bf16.msra.mxu0 %v679
        %792 = vmatprep.subr.bf16.mxu0 %v676
        %793 = vmatpush1.bf16.msra.mxu0 %v675
        %794 = vmatprep.subr.bf16.mxu0 0
        %795 = vmatpush2.bf16.msra.mxu0 0
        %796 = vmatprep.subr.bf16.mxu0 0
        %797 = vmatpush2.bf16.msra.mxu0 0
        %798 = vmatprep.subr.bf16.mxu0 0
        %799 = vmatpush2.bf16.msra.mxu0 0
        %800 = vmatprep.subr.bf16.mxu0 0
        %801 = vmatpush2.bf16.msra.mxu0 0
        %802 = vmatprep.subr.bf16.mxu0 0
        %803 = vmatpush2.bf16.msra.mxu0 0
        %804 = vmatprep.subr.bf16.mxu0 0
        %805 = vmatpush2.bf16.msra.mxu0 0
        %806 = vmatprep.subr.bf16.mxu0 0
        %807 = vmatpush2.bf16.msra.mxu0 0
        %808 = vmatprep.subr.bf16.mxu0 0
        %809 = vmatpush2.bf16.msra.mxu0 0
        %810 = vmatprep.mubr.bf16.mxu0 0
        %811 = vmatmul.mubr.bf16.gmra.mxu0 %v522
        %v812 = vpop.f32.mrf.mxu0
        %v813 = vadd.f32 %v568, %v812
        %v814 = vpop.f32.mrf.mxu0
        %v815 = vadd.f32 %v572, %v814
        %v816 = vpop.f32.mrf.mxu0
        %v817 = vpop.f32.mrf.mxu0
        %818 = vdwg.mxu0
        %v819 = vxor.u32 %v772, 2147483648
        %v820 = vxor.u32 %v774, 2147483648
        %v821 = vxor.u32 %v813, 2147483648
        %v822 = vxor.u32 %v815, 2147483648
        %v823 = vmul.f32 %v819, 1.442695
        %v824 = vpow.pop %v823
        %v825 = vmul.f32 %v820, 1.442695
        %v826 = vpow.pop %v825
        %v827 = vmul.f32 %v821, 1.442695
        %v828 = vpow.pop %v827
        %v829 = vmul.f32 %v822, 1.442695
        %v830 = vpow.pop %v829
        %v831 = vadd.f32 %v824, 1.0
        %v832 = vadd.f32 %v826, 1.0
        %v833 = vadd.f32 %v828, 1.0
        %v834 = vadd.f32 %v830, 1.0
        %v835 = vrcp.pop %v831
        %v836 = vmul.f32 1.0, %v835
        %v837 = vrcp.pop %v832
        %v838 = vmul.f32 1.0, %v837
        %v839 = vrcp.pop %v833
        %v840 = vmul.f32 1.0, %v839
        %v841 = vrcp.pop %v834
        %v842 = vmul.f32 1.0, %v841
        %843 = vst [vmem:[%s337] sm:$0xff] %v836
        %844 = vst [vmem:[%s337 + $0x8] sm:$0xff] %v838
        %845 = vst [vmem:[%s337 + $0x10] sm:$0xff] %v840
        %846 = vst [vmem:[%s337 + $0x18] sm:$0xff] %v842
        %v847 = vld [vmem:[#allocation8 + $0x10] sm:$0xff]
        %v848 = vld [vmem:[#allocation8 + $0x18] sm:$0xff]
        %v849 = vld [vmem:[#allocation8 + $0x30] sm:$0xff]
        %v850 = vld [vmem:[#allocation8 + $0x38] sm:$0xff]
        %v851 = vld [vmem:[#allocation8 + $0x50] sm:$0xff]
        %v852 = vld [vmem:[#allocation8 + $0x58] sm:$0xff]
        %v853 = vld [vmem:[#allocation8 + $0x70] sm:$0xff]
        %v854 = vld [vmem:[#allocation8 + $0x78] sm:$0xff]
        %v855 = vld [vmem:[#allocation8 + $0x90] sm:$0xff]
        %v856 = vld [vmem:[#allocation8 + $0x98] sm:$0xff]
        %v857 = vld [vmem:[#allocation8 + $0xb0] sm:$0xff]
        %v858 = vld [vmem:[#allocation8 + $0xb8] sm:$0xff]
        %v859 = vld [vmem:[#allocation8 + $0xd0] sm:$0xff]
        %v860 = vld [vmem:[#allocation8 + $0xd8] sm:$0xff]
        %v861 = vld [vmem:[#allocation8 + $0xf0] sm:$0xff]
        %v862 = vld [vmem:[#allocation8 + $0xf8] sm:$0xff]
        %v863 = vld [vmem:[#allocation8 + $0x110] sm:$0xff]
        %v864 = vld [vmem:[#allocation8 + $0x118] sm:$0xff]
        %v865 = vld [vmem:[#allocation8 + $0x130] sm:$0xff]
        %v866 = vld [vmem:[#allocation8 + $0x138] sm:$0xff]
        %v867 = vld [vmem:[#allocation8 + $0x150] sm:$0xff]
        %v868 = vld [vmem:[#allocation8 + $0x158] sm:$0xff]
        %v869 = vld [vmem:[#allocation8 + $0x170] sm:$0xff]
        %v870 = vld [vmem:[#allocation8 + $0x178] sm:$0xff]
        %v871 = vld [vmem:[#allocation8 + $0x190] sm:$0xff]
        %v872 = vld [vmem:[#allocation8 + $0x198] sm:$0xff]
        %v873 = vld [vmem:[#allocation8 + $0x1b0] sm:$0xff]
        %v874 = vld [vmem:[#allocation8 + $0x1b8] sm:$0xff]
        %v875 = vld [vmem:[#allocation8 + $0x1d0] sm:$0xff]
        %v876 = vld [vmem:[#allocation8 + $0x1d8] sm:$0xff]
        %v877 = vld [vmem:[#allocation8 + $0x1f0] sm:$0xff]
        %v878 = vld [vmem:[#allocation8 + $0x1f8] sm:$0xff]
        %v879 = vld [vmem:[%s6 + $0x4] sm:$0xf]
        %v881 = vlaneseq
        %v882 = vshrl.u32 %v881, 7
        %v883 = vsub.s32 0, %v882
        %v884 = vrot.slane %v879, %v883
        %v885 = vlaneseq
        %v886 = vshrl.u32 %v885, 7
        %v887 = vsub.s32 1, %v886
        %v888 = vrot.slane %v879, %v887
        %v889 = vlaneseq
        %v890 = vshrl.u32 %v889, 7
        %v891 = vsub.s32 2, %v890
        %v892 = vrot.slane %v879, %v891
        %v893 = vlaneseq
        %v894 = vshrl.u32 %v893, 7
        %v895 = vsub.s32 3, %v894
        %v896 = vrot.slane %v879, %v895
        %v933 = vunpack.c.l.b16 %v847
        %v934 = vunpack.c.h.b16 %v847
        %v935 = vunpack.c.l.b16 %v848
        %v936 = vunpack.c.h.b16 %v848
        %v937 = vunpack.c.l.b16 %v849
        %v938 = vunpack.c.h.b16 %v849
        %v939 = vunpack.c.l.b16 %v850
        %v940 = vunpack.c.h.b16 %v850
        %v941 = vunpack.c.l.b16 %v851
        %v942 = vunpack.c.h.b16 %v851
        %v943 = vunpack.c.l.b16 %v852
        %v944 = vunpack.c.h.b16 %v852
        %v945 = vunpack.c.l.b16 %v853
        %v946 = vunpack.c.h.b16 %v853
        %v947 = vunpack.c.l.b16 %v854
        %v948 = vunpack.c.h.b16 %v854
        %v949 = vunpack.c.l.b16 %v855
        %v950 = vunpack.c.h.b16 %v855
        %v951 = vunpack.c.l.b16 %v856
        %v952 = vunpack.c.h.b16 %v856
        %v953 = vunpack.c.l.b16 %v857
        %v954 = vunpack.c.h.b16 %v857
        %v955 = vunpack.c.l.b16 %v858
        %v956 = vunpack.c.h.b16 %v858
        %v957 = vunpack.c.l.b16 %v859
        %v958 = vunpack.c.h.b16 %v859
        %v959 = vunpack.c.l.b16 %v860
        %v960 = vunpack.c.h.b16 %v860
        %v961 = vunpack.c.l.b16 %v861
        %v962 = vunpack.c.h.b16 %v861
        %v963 = vunpack.c.l.b16 %v862
        %v964 = vunpack.c.h.b16 %v862
        %v965 = vunpack.c.l.b16 %v863
        %v966 = vunpack.c.h.b16 %v863
        %v967 = vunpack.c.l.b16 %v864
        %v968 = vunpack.c.h.b16 %v864
        %v969 = vunpack.c.l.b16 %v865
        %v970 = vunpack.c.h.b16 %v865
        %v971 = vunpack.c.l.b16 %v866
        %v972 = vunpack.c.h.b16 %v866
        %v973 = vunpack.c.l.b16 %v867
        %v974 = vunpack.c.h.b16 %v867
        %v975 = vunpack.c.l.b16 %v868
        %v976 = vunpack.c.h.b16 %v868
        %v977 = vunpack.c.l.b16 %v869
        %v978 = vunpack.c.h.b16 %v869
        %v979 = vunpack.c.l.b16 %v870
        %v980 = vunpack.c.h.b16 %v870
        %v981 = vunpack.c.l.b16 %v871
        %v982 = vunpack.c.h.b16 %v871
        %v983 = vunpack.c.l.b16 %v872
        %v984 = vunpack.c.h.b16 %v872
        %v985 = vunpack.c.l.b16 %v873
        %v986 = vunpack.c.h.b16 %v873
        %v987 = vunpack.c.l.b16 %v874
        %v988 = vunpack.c.h.b16 %v874
        %v989 = vunpack.c.l.b16 %v875
        %v990 = vunpack.c.h.b16 %v875
        %v991 = vunpack.c.l.b16 %v876
        %v992 = vunpack.c.h.b16 %v876
        %v993 = vunpack.c.l.b16 %v877
        %v994 = vunpack.c.h.b16 %v877
        %v995 = vunpack.c.l.b16 %v878
        %v996 = vunpack.c.h.b16 %v878
        %v997 = vpack.c.b16 %v937, %v933
        %v998 = vpack.c.b16 %v938, %v934
        %v999 = vpack.c.b16 %v939, %v935
        %v1000 = vpack.c.b16 %v940, %v936
        %v1001 = vpack.c.b16 %v945, %v941
        %v1002 = vpack.c.b16 %v946, %v942
        %v1003 = vpack.c.b16 %v947, %v943
        %v1004 = vpack.c.b16 %v948, %v944
        %v1005 = vpack.c.b16 %v953, %v949
        %v1006 = vpack.c.b16 %v954, %v950
        %v1007 = vpack.c.b16 %v955, %v951
        %v1008 = vpack.c.b16 %v956, %v952
        %v1009 = vpack.c.b16 %v961, %v957
        %v1010 = vpack.c.b16 %v962, %v958
        %v1011 = vpack.c.b16 %v963, %v959
        %v1012 = vpack.c.b16 %v964, %v960
        %v1013 = vpack.c.b16 %v969, %v965
        %v1014 = vpack.c.b16 %v970, %v966
        %v1015 = vpack.c.b16 %v971, %v967
        %v1016 = vpack.c.b16 %v972, %v968
        %v1017 = vpack.c.b16 %v977, %v973
        %v1018 = vpack.c.b16 %v978, %v974
        %v1019 = vpack.c.b16 %v979, %v975
        %v1020 = vpack.c.b16 %v980, %v976
        %v1021 = vpack.c.b16 %v985, %v981
        %v1022 = vpack.c.b16 %v986, %v982
        %v1023 = vpack.c.b16 %v987, %v983
        %v1024 = vpack.c.b16 %v988, %v984
        %v1025 = vpack.c.b16 %v993, %v989
        %v1026 = vpack.c.b16 %v994, %v990
        %v1027 = vpack.c.b16 %v995, %v991
        %v1028 = vpack.c.b16 %v996, %v992
        %1061 = vmatprep.subr.bf16.mxu0 %v1026
        %1062 = vmatpush1.bf16.msra.mxu0 %v1025
        %1063 = vmatprep.subr.bf16.mxu0 %v1022
        %1064 = vmatpush1.bf16.msra.mxu0 %v1021
        %1065 = vmatprep.subr.bf16.mxu0 %v1018
        %1066 = vmatpush1.bf16.msra.mxu0 %v1017
        %1067 = vmatprep.subr.bf16.mxu0 %v1014
        %1068 = vmatpush1.bf16.msra.mxu0 %v1013
        %1069 = vmatprep.subr.bf16.mxu0 %v1010
        %1070 = vmatpush1.bf16.msra.mxu0 %v1009
        %1071 = vmatprep.subr.bf16.mxu0 %v1006
        %1072 = vmatpush1.bf16.msra.mxu0 %v1005
        %1073 = vmatprep.subr.bf16.mxu0 %v1002
        %1074 = vmatpush1.bf16.msra.mxu0 %v1001
        %1075 = vmatprep.subr.bf16.mxu0 %v998
        %1076 = vmatpush1.bf16.msra.mxu0 %v997
        %1077 = vmatprep.subr.bf16.mxu0 0
        %1078 = vmatpush2.bf16.msra.mxu0 0
        %1079 = vmatprep.subr.bf16.mxu0 0
        %1080 = vmatpush2.bf16.msra.mxu0 0
        %1081 = vmatprep.subr.bf16.mxu0 0
        %1082 = vmatpush2.bf16.msra.mxu0 0
        %1083 = vmatprep.subr.bf16.mxu0 0
        %1084 = vmatpush2.bf16.msra.mxu0 0
        %1085 = vmatprep.subr.bf16.mxu0 0
        %1086 = vmatpush2.bf16.msra.mxu0 0
        %1087 = vmatprep.subr.bf16.mxu0 0
        %1088 = vmatpush2.bf16.msra.mxu0 0
        %1089 = vmatprep.subr.bf16.mxu0 0
        %1090 = vmatpush2.bf16.msra.mxu0 0
        %1091 = vmatprep.subr.bf16.mxu0 0
        %1092 = vmatpush2.bf16.msra.mxu0 0
        %1093 = vmatprep.mubr.bf16.mxu0 0
        %1094 = vmatmul.mubr.bf16.gmra.mxu0 %v522
        %v1095 = vpop.f32.mrf.mxu0
        %v1096 = vadd.f32 %v884, %v1095
        %v1097 = vpop.f32.mrf.mxu0
        %v1098 = vadd.f32 %v888, %v1097
        %v1099 = vpop.f32.mrf.mxu0
        %v1100 = vpop.f32.mrf.mxu0
        %1101 = vdwg.mxu0
        %1102 = vmatprep.subr.bf16.mxu0 %v1028
        %1103 = vmatpush1.bf16.msra.mxu0 %v1027
        %1104 = vmatprep.subr.bf16.mxu0 %v1024
        %1105 = vmatpush1.bf16.msra.mxu0 %v1023
        %1106 = vmatprep.subr.bf16.mxu0 %v1020
        %1107 = vmatpush1.bf16.msra.mxu0 %v1019
        %1108 = vmatprep.subr.bf16.mxu0 %v1016
        %1109 = vmatpush1.bf16.msra.mxu0 %v1015
        %1110 = vmatprep.subr.bf16.mxu0 %v1012
        %1111 = vmatpush1.bf16.msra.mxu0 %v1011
        %1112 = vmatprep.subr.bf16.mxu0 %v1008
        %1113 = vmatpush1.bf16.msra.mxu0 %v1007
        %1114 = vmatprep.subr.bf16.mxu0 %v1004
        %1115 = vmatpush1.bf16.msra.mxu0 %v1003
        %1116 = vmatprep.subr.bf16.mxu0 %v1000
        %1117 = vmatpush1.bf16.msra.mxu0 %v999
        %1118 = vmatprep.subr.bf16.mxu0 0
        %1119 = vmatpush2.bf16.msra.mxu0 0
        %1120 = vmatprep.subr.bf16.mxu0 0
        %1121 = vmatpush2.bf16.msra.mxu0 0
        %1122 = vmatprep.subr.bf16.mxu0 0
        %1123 = vmatpush2.bf16.msra.mxu0 0
        %1124 = vmatprep.subr.bf16.mxu0 0
        %1125 = vmatpush2.bf16.msra.mxu0 0
        %1126 = vmatprep.subr.bf16.mxu0 0
        %1127 = vmatpush2.bf16.msra.mxu0 0
        %1128 = vmatprep.subr.bf16.mxu0 0
        %1129 = vmatpush2.bf16.msra.mxu0 0
        %1130 = vmatprep.subr.bf16.mxu0 0
        %1131 = vmatpush2.bf16.msra.mxu0 0
        %1132 = vmatprep.subr.bf16.mxu0 0
        %1133 = vmatpush2.bf16.msra.mxu0 0
        %1134 = vmatprep.mubr.bf16.mxu0 0
        %1135 = vmatmul.mubr.bf16.gmra.mxu0 %v522
        %v1136 = vpop.f32.mrf.mxu0
        %v1137 = vadd.f32 %v892, %v1136
        %v1138 = vpop.f32.mrf.mxu0
        %v1139 = vadd.f32 %v896, %v1138
        %v1140 = vpop.f32.mrf.mxu0
        %v1141 = vpop.f32.mrf.mxu0
        %1142 = vdwg.mxu0
        %v1143 = vxor.u32 %v1096, 2147483648
        %v1144 = vxor.u32 %v1098, 2147483648
        %v1145 = vxor.u32 %v1137, 2147483648
        %v1146 = vxor.u32 %v1139, 2147483648
        %v1147 = vmul.f32 %v1143, 1.442695
        %v1148 = vpow.pop %v1147
        %v1149 = vmul.f32 %v1144, 1.442695
        %v1150 = vpow.pop %v1149
        %v1151 = vmul.f32 %v1145, 1.442695
        %v1152 = vpow.pop %v1151
        %v1153 = vmul.f32 %v1146, 1.442695
        %v1154 = vpow.pop %v1153
        %v1155 = vadd.f32 %v1148, 1.0
        %v1156 = vadd.f32 %v1150, 1.0
        %v1157 = vadd.f32 %v1152, 1.0
        %v1158 = vadd.f32 %v1154, 1.0
        %v1159 = vrcp.pop %v1155
        %v1160 = vmul.f32 1.0, %v1159
        %v1161 = vrcp.pop %v1156
        %v1162 = vmul.f32 1.0, %v1161
        %v1163 = vrcp.pop %v1157
        %v1164 = vmul.f32 1.0, %v1163
        %v1165 = vrcp.pop %v1158
        %v1166 = vmul.f32 1.0, %v1165
        %1167 = vst [vmem:[%s337 + $0x20] sm:$0xff] %v1160
        %1168 = vst [vmem:[%s337 + $0x28] sm:$0xff] %v1162
        %1169 = vst [vmem:[%s337 + $0x30] sm:$0xff] %v1164
        %1170 = vst [vmem:[%s337 + $0x38] sm:$0xff] %v1166
        %s1171 = sand.u32 %s186, 1
        %s1172 = scalar_lea.sflag [#allocation4], %s1171
        %s1173 = sand.u32 %s186, 1
        %s1174 = smul.addr %s1173, 64
        %s1175 = scalar_lea.vmem [#allocation10], %s1174
        // Predicated region
        $region65: #{tpu_custom_call.1} parent=47 // pred_check
          %p1176 = pneg %p196
        $region66: #{tpu_custom_call.1} parent=47 // pred_check_branch
          %1178 = sbr.rel (%p1176) target = $region68
        $region67: #{tpu_custom_call.1} parent=47 // pred_region
          %s1180 = ssub.s32 1024, 1024
          %1181 = vsyncadd %s1172, %s1180
          %s1182 = smul.addr %s26, 8
          %s1183 = smul.addr %s1182, 128
          %s1184 = scalar_lea.hbm %s7, %s1183
          %s1186 = sshll.u32 %s1175, 4
          %s1187 = int_to_ptr.vmem [resolvable:$true] %s1186
          %1189 = dma.vmem_to_hbm [thread:$0]  %s1187, 1024, %s1184, %s1172
        $region68: #{tpu_custom_call.1} parent=47 // pred_fallthru
          _
      $region48: #{tpu_custom_call.1} parent=5 // pred_fallthru
        _
      %p1190 = scmp.le.s32.totalorder 2, %s21
      // Predicated region
      $region69: #{tpu_custom_call.1} parent=5 // pred_check
        %p1191 = pneg %p1190
      $region70: #{tpu_custom_call.1} parent=5 // pred_check_branch
        %1193 = sbr.rel (%p1191) target = $region72
      $region71: #{tpu_custom_call.1} parent=5 // pred_region
        %s1194 = ssub.s32 %s21, 2
        // Predicated region
        $region73: #{tpu_custom_call.1} parent=71 // pred_check
          %p1195 = pneg %p202
        $region74: #{tpu_custom_call.1} parent=71 // pred_check_branch
          %1197 = sbr.rel (%p1195) target = $region76
        $region75: #{tpu_custom_call.1} parent=71 // pred_region
          %s1198 = sand.u32 %s187, 1
          %s1199 = scalar_lea.sflag [#allocation4], %s1198
          %s1200 = sand.u32 %s187, 1
          %s1201 = smul.addr %s1200, 64
          %s1202 = scalar_lea.vmem [#allocation10], %s1201
          %1203 = dma.done %s1199, 1024
        $region76: #{tpu_custom_call.1} parent=71 // pred_fallthru
          _
      $region72: #{tpu_custom_call.1} parent=5 // pred_fallthru
        _
    $region6: #{tpu_custom_call.1} parent=1 // loop_footer
      %s25 = sadd.s32 1, %s21
    $region7: #{tpu_custom_call.1} parent=1 // loop_footer_branch
      %20 = sbr.rel target = $region3
    $region8: #{tpu_custom_call.1} parent=1 // loop_exit
      _
    %1204 = vsyncpa [#allocation3], 1
    %s1205 = scalar_lea.sflag [#allocation3], 1
    %1206 = vsyncpa %s1205, 1
    %1207 = vsyncpa [#allocation6], 1
    %1208 = vsyncpa [#allocation9], 1
    %1209 = vsyncpa [#allocation4], 1
    %s1210 = scalar_lea.sflag [#allocation4], 1
    %1211 = vsyncpa %s1210, 1

</llo_original>
